<compile_context>
chip_gen: v7x
topology: tpu7x:2x2x1
jax: 0.10.0
libtpu: 0.0.40
codegen_flags: <defaults>
</compile_context>

<pallas_src>
import functools

import jax
import jax.numpy as jnp
from jax.experimental import pallas as pl
from jax.experimental.pallas import tpu as pltpu

_LANE = 128
_SQRT_2_OVER_PI = 0.7978845608028654
_INV_SQRT2 = 0.7071067811865476


def _round_up(x, n):
    return (x + n - 1) // n * n


def _cdiv(a, b):
    return -(-a // b)


def _min_row_tile(dtype):
    # Packed-sublane minimum tile: 8 rows for 4-byte, 16 for 2-byte, 32 for 1-byte dtypes.
    return {4: 8, 2: 16, 1: 32}.get(jnp.dtype(dtype).itemsize, 8)


def _vmem_capacity_bytes():
    """Per-TensorCore VMEM capacity; conservative fallback if the query fails."""
    try:
        info = pltpu.get_tpu_info()
        for attr in ("vmem_capacity_bytes", "vmem_size_bytes", "vmem_bytes"):
            cap = getattr(info, attr, None)
            if cap:
                return int(cap)
    except Exception:
        pass
    return 64 << 20  # v7x per-TensorCore floor


def _gelu(h, approximate):
    if approximate:
        # tanh approximation -> EUP slot (frees VALU on v6e/v7x); numerics differ
        # slightly from torch.nn.GELU() default.
        return 0.5 * h * (1.0 + jnp.tanh(_SQRT_2_OVER_PI * (h + 0.044715 * h * h * h)))
    # Exact GELU: matches torch.nn.GELU() default.
    return 0.5 * h * (1.0 + jax.lax.erf(h * _INV_SQRT2))


# --------------------------------------------------------------------------- kernels
def _mlp_resident_kernel(x_ref, w1_ref, b1_ref, w2_ref, b2_ref, o_ref, *, approximate_gelu):
    # x_ref:  (TM, in_p)   row tile (pipelined)
    # w1_ref: (in_p, hid_p), b1_ref: (1, hid_p)   -- VMEM resident (DMA'd once)
    # w2_ref: (hid_p, out_p), b2_ref: (1, out_p)  -- VMEM resident
    # o_ref:  (TM, out_p)  row tile (pipelined)
    x = x_ref[...]
    h = jnp.dot(x, w1_ref[...], preferred_element_type=jnp.float32)
    h = h + b1_ref[...].astype(jnp.float32)
    h = _gelu(h, approximate_gelu)
    # dropout(p=0.0) is identity -> skipped.
    o = jnp.dot(h.astype(w2_ref.dtype), w2_ref[...], preferred_element_type=jnp.float32)
    o = o + b2_ref[...].astype(jnp.float32)
    o_ref[...] = o.astype(o_ref.dtype)


def _mlp_streamed_kernel(x_ref, w1_ref, b1_ref, w2_ref, b2_ref, o_ref, acc_ref, *,
                         approximate_gelu):
    # Hidden-chunked / weight-streaming path.  Grid = (row tiles, hidden chunks).
    # x_ref:  (TM, in_p)  -- block index constant across k -> fetched once per row tile
    # w1_ref: (in_p, TH), b1_ref: (1, TH), w2_ref: (TH, out_p) -- streamed per hidden chunk
    # b2_ref: (1, out_p)  -- VMEM resident
    # acc_ref: (TM, out_p) f32 scratch accumulator
    k = pl.program_id(1)

    @pl.when(k == 0)
    def _():
        acc_ref[...] = jnp.zeros_like(acc_ref)

    h = jnp.dot(x_ref[...], w1_ref[...], preferred_element_type=jnp.float32)
    h = h + b1_ref[...].astype(jnp.float32)
    h = _gelu(h, approximate_gelu)
    acc_ref[...] += jnp.dot(h.astype(w2_ref.dtype), w2_ref[...],
                            preferred_element_type=jnp.float32)

    @pl.when(k == pl.num_programs(1) - 1)
    def _():
        o_ref[...] = (acc_ref[...] + b2_ref[...].astype(jnp.float32)).astype(o_ref.dtype)


# --------------------------------------------------------------------------- planning
def _resident_tile_bytes(tm, in_p, hid_p, out_p, dtype_bytes):
    return (2 * tm * (in_p + out_p) * dtype_bytes      # double-buffered x / out tiles
            + tm * hid_p * (4 + dtype_bytes)           # f32 hidden + cast-back copy
            + tm * out_p * 4)                          # f32 fc2 result before final cast


def _streaming_tile_bytes(tm, th, in_p, out_p, dtype_bytes):
    return (2 * tm * in_p * dtype_bytes                          # x tile (double-buffered)
            + 2 * (in_p * th + th * out_p + th) * dtype_bytes    # w1/b1/w2 chunks (x2 buffers)
            + out_p * dtype_bytes                                # b2 resident
            + 2 * tm * out_p * dtype_bytes                       # out tile (double-buffered)
            + tm * out_p * 4                                     # f32 accumulator scratch
            + tm * th * (4 + dtype_bytes)                        # f32 hidden chunk + cast copy
            + tm * out_p * 4)                                    # f32 partial fc2 result


_TM_CANDIDATES = (4096, 2048, 1024, 512, 256, 128, 64, 32, 16, 8)


def _choose_resident_tm(m, in_p, hid_p, out_p, dtype_bytes, budget, min_tm, weights_bytes):
    if weights_bytes > budget:
        return None
    m_cap = _round_up(max(m, 1), min_tm)
    for tm in _TM_CANDIDATES:
        if tm < min_tm or tm > m_cap:
            continue
        if weights_bytes + _resident_tile_bytes(tm, in_p, hid_p, out_p, dtype_bytes) <= budget:
            return tm
    if weights_bytes + _resident_tile_bytes(min_tm, in_p, hid_p, out_p, dtype_bytes) <= budget:
        return min_tm
    return None


def _plan_streaming(m, in_p, hid_p, out_p, dtype_bytes, budget, min_tm):
    m_cap = _round_up(max(m, 1), min_tm)
    tms = [t for t in _TM_CANDIDATES if min_tm <= t <= m_cap] or [min_tm]
    ths = [t for t in (4096, 2048, 1024, 512, 256, 128) if t <= hid_p and hid_p % t == 0]
    if not ths:
        ths = [hid_p]
    # Prefer the largest row tile (weights are re-streamed once per row tile), then the
    # largest hidden chunk that still fits.
    for tm in tms:
        for th in ths:
            if _streaming_tile_bytes(tm, th, in_p, out_p, dtype_bytes) <= budget:
                return tm, th
    return tms[-1], ths[-1]  # best effort


def _balance_row_tiles(m, tm, min_tm):
    """Shrink the row tile to minimize padding waste and give both v7x TCs work."""
    g = _cdiv(m, tm)
    if g == 1 and _round_up(m, min_tm) >= 2 * min_tm:
        g = 2
    tm = max(_round_up(_cdiv(m, g), min_tm), min_tm)
    g = _cdiv(m, tm)
    return tm, g


# --------------------------------------------------------------------------- wrappers
def prepare_bilateral_mlp_params(w1, b1, w2, b2, dtype=None):
    """One-time transpose + lane-pad of PyTorch-layout weights (hoisted out of the call path).

    w1: (hidden, in)  b1: (hidden,)   w2: (out, hidden)  b2: (out,)
    """
    hidden_features, in_features = w1.shape
    out_features = w2.shape[0]
    dtype = jnp.dtype(dtype) if dtype is not None else jnp.dtype(w1.dtype)

    in_p = _round_up(in_features, _LANE)
    hid_p = _round_up(hidden_features, _LANE)
    out_p = _round_up(out_features, _LANE)

    w1_t = w1.T.astype(dtype)
    w2_t = w2.T.astype(dtype)
    # Zero padding is exact: padded x cols hit zero weight rows, padded hidden cols have
    # zero weight+bias (GELU(0)=0), padded output cols are sliced off.
    if w1_t.shape != (in_p, hid_p):
        w1_t = jnp.zeros((in_p, hid_p), dtype).at[:in_features, :hidden_features].set(w1_t)
    if w2_t.shape != (hid_p, out_p):
        w2_t = jnp.zeros((hid_p, out_p), dtype).at[:hidden_features, :out_features].set(w2_t)
    b1_p = jnp.zeros((1, hid_p), dtype).at[0, :hidden_features].set(b1.astype(dtype))
    b2_p = jnp.zeros((1, out_p), dtype).at[0, :out_features].set(b2.astype(dtype))

    return dict(w1=w1_t, b1=b1_p, w2=w2_t, b2=b2_p, dtype=dtype,
                in_features=in_features, hidden_features=hidden_features,
                out_features=out_features)


def bilateral_mlp_apply(x, params, *, approximate_gelu=False, force_weight_streaming=False):
    """Forward pass of BilateralMLP using pre-prepared (transposed, padded) params."""
    w1_t, b1_p, w2_t, b2_p = params["w1"], params["b1"], params["w2"], params["b2"]
    in_features = params["in_features"]
    out_features = params["out_features"]
    dtype = params["dtype"]
    dtype_bytes = jnp.dtype(dtype).itemsize

    in_p, hid_p = w1_t.shape
    out_p = w2_t.shape[1]
    assert x.shape[-1] == in_features

    lead_shape = x.shape[:-1]
    x2d = x.reshape(-1, in_features).astype(dtype)
    m = x2d.shape[0]
    min_tm = _min_row_tile(dtype)

    # Generation-aware VMEM budgeting.
    cap = _vmem_capacity_bytes()
    budget = int(cap * 0.72)          # ~46 MiB on v7x (64 MiB/TC), ~92 MiB on v5e/v6e (128 MiB)
    limit_cap = max(cap - (8 << 20), 16 << 20)   # never request more than physical - headroom

    weights_bytes = (w1_t.size + w2_t.size + b1_p.size + b2_p.size) * dtype_bytes

    tm = None
    use_streaming = bool(force_weight_streaming)
    if not use_streaming:
        tm = _choose_resident_tm(m, in_p, hid_p, out_p, dtype_bytes, budget, min_tm,
                                 weights_bytes)
        if tm is None:
            use_streaming = True   # resident weights don't fit -> stream hidden chunks

    if use_streaming:
        tm, th = _plan_streaming(m, in_p, hid_p, out_p, dtype_bytes, budget, min_tm)
    tm, g_m = _balance_row_tiles(m, tm, min_tm)
    m_p = tm * g_m

    # Pad activations only when needed (skip the extra HBM round trip if aligned).
    if (m_p, in_p) == x2d.shape:
        x_p = x2d
    else:
        x_p = jnp.zeros((m_p, in_p), dtype).at[:m, :in_features].set(x2d)

    flops = 2 * m_p * (in_p * hid_p + hid_p * out_p)
    transcendentals = m_p * hid_p

    if not use_streaming:
        tiles_bytes = _resident_tile_bytes(tm, in_p, hid_p, out_p, dtype_bytes)
        vmem_limit = int(min(max(weights_bytes + tiles_bytes + (4 << 20), 32 << 20), limit_cap))
        cost = pl.CostEstimate(
            flops=flops, transcendentals=transcendentals,
            bytes_accessed=(x_p.size + w1_t.size + w2_t.size + b1_p.size + b2_p.size
                            + m_p * out_p) * dtype_bytes)
        out_padded = pl.pallas_call(
            functools.partial(_mlp_resident_kernel, approximate_gelu=approximate_gelu),
            out_shape=jax.ShapeDtypeStruct((m_p, out_p), dtype),
            grid_spec=pltpu.PrefetchScalarGridSpec(
                num_scalar_prefetch=0,
                grid=(g_m,),
                in_specs=[
                    # x row tiles stream through the double-buffered pipeline.
                    pl.BlockSpec((tm, in_p), lambda i: (i, 0)),
                    # Weights / biases: whole-array VMEM residents (single copy, one DMA).
                    pl.BlockSpec(memory_space=pltpu.MemorySpace.VMEM),
                    pl.BlockSpec(memory_space=pltpu.MemorySpace.VMEM),
                    pl.BlockSpec(memory_space=pltpu.MemorySpace.VMEM),
                    pl.BlockSpec(memory_space=pltpu.MemorySpace.VMEM),
                ],
                out_specs=pl.BlockSpec((tm, out_p), lambda i: (i, 0)),
            ),
            compiler_params=pltpu.CompilerParams(
                dimension_semantics=("parallel",),
                vmem_limit_bytes=vmem_limit,
            ),
            cost_estimate=cost,
        )(x_p, w1_t, b1_p, w2_t, b2_p)
    else:
        g_k = hid_p // th
        tiles_bytes = _streaming_tile_bytes(tm, th, in_p, out_p, dtype_bytes)
        vmem_limit = int(min(max(tiles_bytes + (4 << 20), 32 << 20), limit_cap))
        cost = pl.CostEstimate(
            flops=flops, transcendentals=transcendentals,
            bytes_accessed=(x_p.size + m_p * out_p) * dtype_bytes
                           + g_m * (w1_t.size + w2_t.size + b1_p.size) * dtype_bytes
                           + b2_p.size * dtype_bytes)
        out_padded = pl.pallas_call(
            functools.partial(_mlp_streamed_kernel, approximate_gelu=approximate_gelu),
            out_shape=jax.ShapeDtypeStruct((m_p, out_p), dtype),
            grid_spec=pltpu.PrefetchScalarGridSpec(
                num_scalar_prefetch=0,
                grid=(g_m, g_k),
                in_specs=[
                    pl.BlockSpec((tm, in_p), lambda i, k: (i, 0)),     # x tile (constant in k)
                    pl.BlockSpec((in_p, th), lambda i, k: (0, k)),     # w1 hidden chunk
                    pl.BlockSpec((1, th), lambda i, k: (0, k)),        # b1 hidden chunk
                    pl.BlockSpec((th, out_p), lambda i, k: (k, 0)),    # w2 hidden chunk
                    pl.BlockSpec(memory_space=pltpu.MemorySpace.VMEM),  # b2 resident
                ],
                out_specs=pl.BlockSpec((tm, out_p), lambda i, k: (i, 0)),
                scratch_shapes=[pltpu.VMEM((tm, out_p), jnp.float32)],
            ),
            compiler_params=pltpu.CompilerParams(
                dimension_semantics=("parallel", "arbitrary"),
                vmem_limit_bytes=vmem_limit,
            ),
            cost_estimate=cost,
        )(x_p, w1_t, b1_p, w2_t, b2_p)

    # Slice only when padding was actually introduced.
    if (m_p, out_p) != (m, out_features):
        out2d = out_padded[:m, :out_features]
    else:
        out2d = out_padded
    return out2d.reshape(*lead_shape, out_features)


def bilateral_mlp(x, w1, b1, w2, b2, *, approximate_gelu=False, force_weight_streaming=False):
    """Convenience wrapper taking PyTorch-layout weights (prepares them on the fly)."""
    params = prepare_bilateral_mlp_params(w1, b1, w2, b2, dtype=x.dtype)
    return bilateral_mlp_apply(x, params, approximate_gelu=approximate_gelu,
                               force_weight_streaming=force_weight_streaming)


def init_params(key, in_features, hidden_features, out_features, dtype=jnp.float32):
    k1, k2 = jax.random.split(key)
    # Matches the module's init: weight ~ N(0, 0.01), bias = 0.
    w1 = jax.random.normal(k1, (hidden_features, in_features), dtype) * 0.01
    b1 = jnp.zeros((hidden_features,), dtype)
    w2 = jax.random.normal(k2, (out_features, hidden_features), dtype) * 0.01
    b2 = jnp.zeros((out_features,), dtype)
    return w1, b1, w2, b2


if __name__ == "__main__":
    key = jax.random.PRNGKey(0)
    kx, kp = jax.random.split(key)

    # Small shapes consistent with an MLP over token features.
    batch, seq, in_features = 2, 8, 32
    hidden_features = 64
    out_features = in_features  # module default

    x = jax.random.normal(kx, (batch, seq, in_features), jnp.float32)
    w1, b1, w2, b2 = init_params(kp, in_features, hidden_features, out_features)

    # Hoisted (one-time) weight transpose + pad.
    params = prepare_bilateral_mlp_params(w1, b1, w2, b2)

    # Plain-JAX reference (exact-erf GELU = torch.nn.GELU() default, dropout p=0 = identity).
    h_ref = x @ w1.T + b1
    h_ref = 0.5 * h_ref * (1.0 + jax.lax.erf(h_ref / jnp.sqrt(2.0)))
    ref = h_ref @ w2.T + b2

    # 1) Default resident-weight path.
    out = jax.block_until_ready(bilateral_mlp_apply(x, params))
    assert out.shape == (batch, seq, out_features)
    assert jnp.allclose(out, ref, atol=1e-5, rtol=1e-5)

    # 2) Hidden-chunked / weight-streaming fallback path.
    out_s = jax.block_until_ready(bilateral_mlp_apply(x, params, force_weight_streaming=True))
    assert jnp.allclose(out_s, ref, atol=1e-5, rtol=1e-5)

    # 3) EUP tanh-approx GELU fast path (optional; not bit-matching torch's exact GELU).
    out_a = jax.block_until_ready(bilateral_mlp_apply(x, params, approximate_gelu=True))
    h_a = x @ w1.T + b1
    h_a = 0.5 * h_a * (1.0 + jnp.tanh(_SQRT_2_OVER_PI * (h_a + 0.044715 * h_a ** 3)))
    ref_a = h_a @ w2.T + b2
    assert jnp.allclose(out_a, ref_a, atol=1e-5, rtol=1e-5)

    print("KERNEL_OK")
</pallas_src>

<mosaic_0001>
module attributes {stable_mosaic.version = 11 : i64} {
  func.func @_mlp_resident_kernel(%arg0: i32, %arg1: memref<8x128xf32, #tpu.memory_space<vmem>>, %arg2: memref<128x128xf32, #tpu.memory_space<vmem>>, %arg3: memref<1x128xf32, #tpu.memory_space<vmem>>, %arg4: memref<128x128xf32, #tpu.memory_space<vmem>>, %arg5: memref<1x128xf32, #tpu.memory_space<vmem>>, %arg6: memref<8x128xf32, #tpu.memory_space<vmem>>) attributes {dimension_semantics = [#tpu.dimension_semantics<parallel>], iteration_bounds = array<i64: 2>, scalar_prefetch = 0 : i64, scratch_operands = 0 : i64, tpu.core_type = #tpu.core_type<tc>, window_params = [{transform_indices = @transform_0, window_bounds = array<i64: 8, 128>}, {pipeline_mode = #tpu.pipeline_mode<synchronous>, transform_indices = @transform_1, window_bounds = array<i64: 128, 128>}, {pipeline_mode = #tpu.pipeline_mode<synchronous>, transform_indices = @transform_2, window_bounds = array<i64: 1, 128>}, {pipeline_mode = #tpu.pipeline_mode<synchronous>, transform_indices = @transform_3, window_bounds = array<i64: 128, 128>}, {pipeline_mode = #tpu.pipeline_mode<synchronous>, transform_indices = @transform_4, window_bounds = array<i64: 1, 128>}, {transform_indices = @transform_5, window_bounds = array<i64: 8, 128>}]} {
    %c0 = arith.constant 0 : index
    %c0_0 = arith.constant 0 : index
    %0 = vector.load %arg1[%c0, %c0_0] : memref<8x128xf32, #tpu.memory_space<vmem>>, vector<8x128xf32>
    %c0_1 = arith.constant 0 : index
    %c0_2 = arith.constant 0 : index
    %1 = vector.load %arg2[%c0_1, %c0_2] : memref<128x128xf32, #tpu.memory_space<vmem>>, vector<128x128xf32>
    %cst = arith.constant dense<0.000000e+00> : vector<8x128xf32>
    %2 = tpu.matmul %0, %1, %cst {dimension_numbers = #tpu.dot_dimension_numbers<[1], [0], [0], [1], [0, 0, 1, 1], [], []>} : vector<8x128xf32>, vector<128x128xf32>, vector<8x128xf32> -> vector<8x128xf32>
    %c0_3 = arith.constant 0 : index
    %c0_4 = arith.constant 0 : index
    %3 = vector.load %arg3[%c0_3, %c0_4] : memref<1x128xf32, #tpu.memory_space<vmem>>, vector<1x128xf32>
    %4 = vector.broadcast %3 : vector<1x128xf32> to vector<8x128xf32>
    %5 = arith.addf %2, %4 : vector<8x128xf32>
    %cst_5 = arith.constant 5.000000e-01 : f32
    %6 = vector.broadcast %cst_5 : f32 to vector<8x128xf32>
    %7 = arith.mulf %6, %5 : vector<8x128xf32>
    %cst_6 = arith.constant 0.707106769 : f32
    %8 = vector.broadcast %cst_6 : f32 to vector<8x128xf32>
    %9 = arith.mulf %5, %8 : vector<8x128xf32>
    %10 = math.erf %9 : vector<8x128xf32>
    %cst_7 = arith.constant 1.000000e+00 : f32
    %11 = vector.broadcast %cst_7 : f32 to vector<8x128xf32>
    %12 = arith.addf %11, %10 : vector<8x128xf32>
    %13 = arith.mulf %7, %12 : vector<8x128xf32>
    %c0_8 = arith.constant 0 : index
    %c0_9 = arith.constant 0 : index
    %14 = vector.load %arg4[%c0_8, %c0_9] : memref<128x128xf32, #tpu.memory_space<vmem>>, vector<128x128xf32>
    %cst_10 = arith.constant dense<0.000000e+00> : vector<8x128xf32>
    %15 = tpu.matmul %13, %14, %cst_10 {dimension_numbers = #tpu.dot_dimension_numbers<[1], [0], [0], [1], [0, 0, 1, 1], [], []>} : vector<8x128xf32>, vector<128x128xf32>, vector<8x128xf32> -> vector<8x128xf32>
    %c0_11 = arith.constant 0 : index
    %c0_12 = arith.constant 0 : index
    %16 = vector.load %arg5[%c0_11, %c0_12] : memref<1x128xf32, #tpu.memory_space<vmem>>, vector<1x128xf32>
    %17 = vector.broadcast %16 : vector<1x128xf32> to vector<8x128xf32>
    %18 = arith.addf %15, %17 : vector<8x128xf32>
    %c0_13 = arith.constant 0 : index
    %c0_14 = arith.constant 0 : index
    %19 = vector.load %arg6[%c0_13, %c0_14] : memref<8x128xf32, #tpu.memory_space<vmem>>, vector<8x128xf32>
    tpu.vector_store %arg6[%c0_13, %c0_14], %18 {strides = array<i32>} : memref<8x128xf32, #tpu.memory_space<vmem>>, vector<8x128xf32>,
    return
  }
  func.func @transform_0(%arg0: i32) -> (i32, i32) {
    %c0_i32 = arith.constant 0 : i32
    %c0_i32_0 = arith.constant 0 : i32
    return %arg0, %c0_i32 : i32, i32
  }
  func.func @transform_1(%arg0: i32) -> (i32, i32) {
    %c0_i32 = arith.constant 0 : i32
    %c0_i32_0 = arith.constant 0 : i32
    %c0_i32_1 = arith.constant 0 : i32
    return %c0_i32, %c0_i32_0 : i32, i32
  }
  func.func @transform_2(%arg0: i32) -> (i32, i32) {
    %c0_i32 = arith.constant 0 : i32
    %c0_i32_0 = arith.constant 0 : i32
    %c0_i32_1 = arith.constant 0 : i32
    return %c0_i32, %c0_i32_0 : i32, i32
  }
  func.func @transform_3(%arg0: i32) -> (i32, i32) {
    %c0_i32 = arith.constant 0 : i32
    %c0_i32_0 = arith.constant 0 : i32
    %c0_i32_1 = arith.constant 0 : i32
    return %c0_i32, %c0_i32_0 : i32, i32
  }
  func.func @transform_4(%arg0: i32) -> (i32, i32) {
    %c0_i32 = arith.constant 0 : i32
    %c0_i32_0 = arith.constant 0 : i32
    %c0_i32_1 = arith.constant 0 : i32
    return %c0_i32, %c0_i32_0 : i32, i32
  }
  func.func @transform_5(%arg0: i32) -> (i32, i32) {
    %c0_i32 = arith.constant 0 : i32
    %c0_i32_0 = arith.constant 0 : i32
    return %arg0, %c0_i32 : i32, i32
  }
}

</mosaic_0001>

<llo_original>
// kernel: tpu_custom_call.1
$region0: #{tpu_custom_call.1}
  #allocation0 [shape = 'u32[]', space=smem, size = 0x4, offset = 0x4, fixed_abs, tag = 'smem constant byte address 0x4 - core index']
  #allocation1 [shape = 'u32[144,128]{1,0:T(1,128)}', space=vmem, size = 0x12000, scoped, tag = 'internal scratch']
  %s0 = inlined_call_operand.hbm [shape: f32[16,128], index: 0, kind: input, shape index: {}]
  %s1 = inlined_call_operand.hbm [shape: f32[128,128], index: 1, kind: input, shape index: {}]
  %s2 = inlined_call_operand.vmem [shape: f32[1,128], index: 2, kind: input, shape index: {}]
  %s3 = inlined_call_operand.hbm [shape: f32[128,128], index: 3, kind: input, shape index: {}]
  %s4 = inlined_call_operand.vmem [shape: f32[1,128], index: 4, kind: input, shape index: {}]
  %s5 = inlined_call_operand.hbm [shape: f32[16,128], index: 5, kind: output, shape index: {}]
  %s6 = sld [smem:[#allocation0]]
  $region65: #{tpu_custom_call.1} parent=0
    _
  %s8 = ssub.s32 1, %s6
  %s9 = scalar_select 0, %s8, %s6
  $region1: #{tpu_custom_call.1} parent=0
    #allocation2 [shape = 'u8[8192]{0}', space=vmem, size = 0x2000, scoped, tag = 'input window, operand 0']
    #allocation3 [shape = 's32[2]{0}', space=sflag, size = 0x8, scoped, tag = 'scoped memory for tpu_custom_call.1']
    #allocation4 [shape = 's32[2]{0}', space=sflag, size = 0x8, scoped, tag = 'scoped memory for tpu_custom_call.1']
    #allocation5 [shape = 'u8[65536]{0}', space=vmem, size = 0x10000, scoped, tag = 'input window, operand 1, single buffered']
    #allocation6 [shape = 's32[1]{0}', space=sflag, size = 0x4, scoped, tag = 'scoped memory for tpu_custom_call.1']
    #allocation7 [shape = 'u8[65536]{0}', space=vmem, size = 0x10000, scoped, tag = 'input window, operand 3, single buffered']
    #allocation8 [shape = 'u8[8192]{0}', space=vmem, size = 0x2000, scoped, tag = 'output window, operand 0']
    %10 = vsyncpa [#allocation3], 0
    %s11 = scalar_lea.sflag [#allocation3], 1
    %12 = vsyncpa %s11, 0
    %13 = vsyncpa [#allocation6], 0
    %14 = vsyncpa [#allocation4], 0
    %s15 = scalar_lea.sflag [#allocation4], 1
    %16 = vsyncpa %s15, 0
    loop: start=0, step=1, limit=4
    $region2: #{tpu_custom_call.1} parent=1 // loop_pre_header
      _
    $region3: #{tpu_custom_call.1} parent=1 // loop_header
      %s18 = sphi 0, %s22
      %p19 = scmp.ge.s32.totalorder %s18, 4
      %s28 = sphi 0, %s30
      %s31 = sphi 0, %s28
      %s32 = sphi 0, %s31
      %s48 = sphi 0, %s32
      %s52 = sphi 0, %s52
      %s54 = sphi 0, %s52
      %s55 = sphi 0, %s54
      %s69 = sphi 0, %s55
      %s73 = sphi 0, %s73
      %s75 = sphi 0, %s73
      %s76 = sphi 0, %s75
      %s90 = sphi 0, %s76
      %s94 = sphi 0, %s94
      %s96 = sphi 0, %s94
      %s97 = sphi 0, %s96
      %s111 = sphi 0, %s97
      %s115 = sphi 0, %s115
      %s117 = sphi 0, %s115
      %s118 = sphi 0, %s117
      %s132 = sphi 0, %s118
      %s138 = sphi 0, %s140
      %s141 = sphi 0, %s138
      %s142 = sphi 0, %s141
      %s158 = sphi 0, %s142
    $region4: #{tpu_custom_call.1} parent=1 // loop_header_branch
      %21 = sbr.rel (%p19) target = $region8
    $region5: #{tpu_custom_call.1} parent=1 // loop_body
      %s23 = ssub.s32 %s18, 1
      %s24 = ssub.s32 %s18, 2
      %s25 = sadd.s32 %s18, 1
      %s26 = ssub.s32 %s18, %s25
      %p27 = scmp.eq.s32.totalorder %s26, 0
      %s29 = sadd.s32 %s28, 1
      %s30 = scalar_select %p27, %s28, %s29
      %p33 = pneg %p27
      %p34 = scmp.eq.s32.totalorder %s18, 1
      %p35 = por %p33, %p34
      %p36 = scmp.ne.s32.totalorder %s28, %s31
      %p37 = scmp.eq.s32.totalorder %s18, 0
      %p38 = por %p36, %p37
      %p39 = scmp.ne.s32.totalorder %s28, %s31
      %p40 = scmp.eq.s32.totalorder %s23, 1
      %p41 = por %p39, %p40
      %p42 = scmp.ne.s32.totalorder %s31, %s32
      %p43 = scmp.eq.s32.totalorder %s23, 0
      %p44 = por %p42, %p43
      %p45 = scmp.ne.s32.totalorder %s31, %s32
      %p46 = scmp.eq.s32.totalorder %s24, 1
      %p47 = por %p45, %p46
      %p49 = scmp.ne.s32.totalorder %s32, %s48
      %p50 = scmp.eq.s32.totalorder %s24, 0
      %p51 = por %p49, %p50
      %s53 = sadd.s32 %s52, 1
      %p56 = scmp.eq.s32.totalorder %s18, 1
      %p57 = scmp.ne.s32.totalorder %s52, %s54
      %p58 = scmp.eq.s32.totalorder %s18, 0
      %p59 = por %p57, %p58
      %p60 = scmp.ne.s32.totalorder %s52, %s54
      %p61 = scmp.eq.s32.totalorder %s23, 1
      %p62 = por %p60, %p61
      %p63 = scmp.ne.s32.totalorder %s54, %s55
      %p64 = scmp.eq.s32.totalorder %s23, 0
      %p65 = por %p63, %p64
      %p66 = scmp.ne.s32.totalorder %s54, %s55
      %p67 = scmp.eq.s32.totalorder %s24, 1
      %p68 = por %p66, %p67
      %p70 = scmp.ne.s32.totalorder %s55, %s69
      %p71 = scmp.eq.s32.totalorder %s24, 0
      %p72 = por %p70, %p71
      %s74 = sadd.s32 %s73, 1
      %p77 = scmp.eq.s32.totalorder %s18, 1
      %p78 = scmp.ne.s32.totalorder %s73, %s75
      %p79 = scmp.eq.s32.totalorder %s18, 0
      %p80 = por %p78, %p79
      %p81 = scmp.ne.s32.totalorder %s73, %s75
      %p82 = scmp.eq.s32.totalorder %s23, 1
      %p83 = por %p81, %p82
      %p84 = scmp.ne.s32.totalorder %s75, %s76
      %p85 = scmp.eq.s32.totalorder %s23, 0
      %p86 = por %p84, %p85
      %p87 = scmp.ne.s32.totalorder %s75, %s76
      %p88 = scmp.eq.s32.totalorder %s24, 1
      %p89 = por %p87, %p88
      %p91 = scmp.ne.s32.totalorder %s76, %s90
      %p92 = scmp.eq.s32.totalorder %s24, 0
      %p93 = por %p91, %p92
      %s95 = sadd.s32 %s94, 1
      %p98 = scmp.eq.s32.totalorder %s18, 1
      %p99 = scmp.ne.s32.totalorder %s94, %s96
      %p100 = scmp.eq.s32.totalorder %s18, 0
      %p101 = por %p99, %p100
      %p102 = scmp.ne.s32.totalorder %s94, %s96
      %p103 = scmp.eq.s32.totalorder %s23, 1
      %p104 = por %p102, %p103
      %p105 = scmp.ne.s32.totalorder %s96, %s97
      %p106 = scmp.eq.s32.totalorder %s23, 0
      %p107 = por %p105, %p106
      %p108 = scmp.ne.s32.totalorder %s96, %s97
      %p109 = scmp.eq.s32.totalorder %s24, 1
      %p110 = por %p108, %p109
      %p112 = scmp.ne.s32.totalorder %s97, %s111
      %p113 = scmp.eq.s32.totalorder %s24, 0
      %p114 = por %p112, %p113
      %s116 = sadd.s32 %s115, 1
      %p119 = scmp.eq.s32.totalorder %s18, 1
      %p120 = scmp.ne.s32.totalorder %s115, %s117
      %p121 = scmp.eq.s32.totalorder %s18, 0
      %p122 = por %p120, %p121
      %p123 = scmp.ne.s32.totalorder %s115, %s117
      %p124 = scmp.eq.s32.totalorder %s23, 1
      %p125 = por %p123, %p124
      %p126 = scmp.ne.s32.totalorder %s117, %s118
      %p127 = scmp.eq.s32.totalorder %s23, 0
      %p128 = por %p126, %p127
      %p129 = scmp.ne.s32.totalorder %s117, %s118
      %p130 = scmp.eq.s32.totalorder %s24, 1
      %p131 = por %p129, %p130
      %p133 = scmp.ne.s32.totalorder %s118, %s132
      %p134 = scmp.eq.s32.totalorder %s24, 0
      %p135 = por %p133, %p134
      %s136 = ssub.s32 %s18, %s25
      %p137 = scmp.eq.s32.totalorder %s136, 0
      %s139 = sadd.s32 %s138, 1
      %s140 = scalar_select %p137, %s138, %s139
      %p143 = pneg %p137
      %p144 = scmp.eq.s32.totalorder %s18, 1
      %p145 = por %p143, %p144
      %p146 = scmp.ne.s32.totalorder %s138, %s141
      %p147 = scmp.eq.s32.totalorder %s18, 0
      %p148 = por %p146, %p147
      %p149 = scmp.ne.s32.totalorder %s138, %s141
      %p150 = scmp.eq.s32.totalorder %s23, 1
      %p151 = por %p149, %p150
      %p152 = scmp.ne.s32.totalorder %s141, %s142
      %p153 = scmp.eq.s32.totalorder %s23, 0
      %p154 = por %p152, %p153
      %p155 = scmp.ne.s32.totalorder %s141, %s142
      %p156 = scmp.eq.s32.totalorder %s24, 1
      %p157 = por %p155, %p156
      %p159 = scmp.ne.s32.totalorder %s142, %s158
      %p160 = scmp.eq.s32.totalorder %s24, 0
      %p161 = por %p159, %p160
      %p162 = scmp.le.s32.totalorder 1, %s18
      %p163 = scmp.lt.s32.totalorder %s18, 3
      %p164 = pnand %p162, %p163
      %p165 = pneg %p164
      // Predicated region
      $region9: #{tpu_custom_call.1} parent=5 // pred_check
        _
      $region10: #{tpu_custom_call.1} parent=5 // pred_check_branch
        %167 = sbr.rel (%p164) target = $region12
      $region11: #{tpu_custom_call.1} parent=5 // pred_region
        %s168 = ssub.s32 %s18, 1
        // Predicated region
        $region13: #{tpu_custom_call.1} parent=11 // pred_check
          %p169 = pneg %p65
        $region14: #{tpu_custom_call.1} parent=11 // pred_check_branch
          %171 = sbr.rel (%p169) target = $region16
        $region15: #{tpu_custom_call.1} parent=11 // pred_region
          %s173 = ssub.s32 2048, 2048
          %174 = vsyncadd [#allocation6], %s173
          %s175 = sshll.u32 [#allocation5], 4
          %s176 = int_to_ptr.vmem [resolvable:$true] %s175
          %181 = dma.hbm_to_vmem [thread:$0]  %s1, 2048, %s176, [#allocation6], 128, 128, 8
        $region16: #{tpu_custom_call.1} parent=11 // pred_fallthru
          _
        // Predicated region
        $region17: #{tpu_custom_call.1} parent=11 // pred_check
          %p182 = pneg %p86
        $region18: #{tpu_custom_call.1} parent=11 // pred_check_branch
          %184 = sbr.rel (%p182) target = $region20
        $region19: #{tpu_custom_call.1} parent=11 // pred_region
          _
        $region20: #{tpu_custom_call.1} parent=11 // pred_fallthru
          _
        // Predicated region
        $region21: #{tpu_custom_call.1} parent=11 // pred_check
          %p185 = pneg %p107
        $region22: #{tpu_custom_call.1} parent=11 // pred_check_branch
          %187 = sbr.rel (%p185) target = $region24
        $region23: #{tpu_custom_call.1} parent=11 // pred_region
          %s189 = ssub.s32 2048, 2048
          %190 = vsyncadd [#allocation6], %s189
          %s191 = sshll.u32 [#allocation7], 4
          %s192 = int_to_ptr.vmem [resolvable:$true] %s191
          %197 = dma.hbm_to_vmem [thread:$0]  %s3, 2048, %s192, [#allocation6], 128, 128, 8
        $region24: #{tpu_custom_call.1} parent=11 // pred_fallthru
          _
        // Predicated region
        $region25: #{tpu_custom_call.1} parent=11 // pred_check
          %p198 = pneg %p128
        $region26: #{tpu_custom_call.1} parent=11 // pred_check_branch
          %200 = sbr.rel (%p198) target = $region28
        $region27: #{tpu_custom_call.1} parent=11 // pred_region
          _
        $region28: #{tpu_custom_call.1} parent=11 // pred_fallthru
          _
      $region12: #{tpu_custom_call.1} parent=5 // pred_fallthru
        _
      %p201 = scmp.lt.s32.totalorder %s18, 2
      // Predicated region
      $region29: #{tpu_custom_call.1} parent=5 // pred_check
        %p202 = pneg %p201
      $region30: #{tpu_custom_call.1} parent=5 // pred_check_branch
        %204 = sbr.rel (%p202) target = $region32
      $region31: #{tpu_custom_call.1} parent=5 // pred_region
        // Predicated region
        $region33: #{tpu_custom_call.1} parent=31 // pred_check
          %p205 = pneg %p38
        $region34: #{tpu_custom_call.1} parent=31 // pred_check_branch
          %207 = sbr.rel (%p205) target = $region36
        $region35: #{tpu_custom_call.1} parent=31 // pred_region
          %s208 = sand.u32 %s28, 1
          %s209 = scalar_lea.sflag [#allocation3], %s208
          %s210 = sand.u32 %s28, 1
          %s211 = smul.addr %s210, 8
          %s212 = scalar_lea.vmem [#allocation2], %s211
          %s214 = ssub.s32 128, 128
          %215 = vsyncadd %s209, %s214
          %s216 = smul.addr %s18, 128
          %s217 = scalar_lea.hbm %s0, %s216
          %s219 = sshll.u32 %s212, 4
          %s220 = int_to_ptr.vmem [resolvable:$true] %s219
          %222 = dma.hbm_to_vmem [thread:$0]  %s217, 128, %s220, %s209
        $region36: #{tpu_custom_call.1} parent=31 // pred_fallthru
          _
      $region32: #{tpu_custom_call.1} parent=5 // pred_fallthru
        _
      %p223 = scmp.le.s32.totalorder 1, %s18
      %p224 = scmp.lt.s32.totalorder %s18, 3
      %p225 = pnand %p223, %p224
      %p226 = pneg %p225
      // Predicated region
      $region37: #{tpu_custom_call.1} parent=5 // pred_check
        _
      $region38: #{tpu_custom_call.1} parent=5 // pred_check_branch
        %228 = sbr.rel (%p225) target = $region40
      $region39: #{tpu_custom_call.1} parent=5 // pred_region
        %s229 = ssub.s32 %s18, 1
        %s230 = sand.u32 %s31, 1
        %s231 = scalar_lea.sflag [#allocation3], %s230
        %s232 = sand.u32 %s31, 1
        %s233 = smul.addr %s232, 8
        %s234 = scalar_lea.vmem [#allocation2], %s233
        // Predicated region
        $region41: #{tpu_custom_call.1} parent=39 // pred_check
          %p235 = pneg %p44
        $region42: #{tpu_custom_call.1} parent=39 // pred_check_branch
          %237 = sbr.rel (%p235) target = $region44
        $region43: #{tpu_custom_call.1} parent=39 // pred_region
          %238 = dma.done %s231, 128
        $region44: #{tpu_custom_call.1} parent=39 // pred_fallthru
          _
        // Predicated region
        $region45: #{tpu_custom_call.1} parent=39 // pred_check
          %p239 = pneg %p65
        $region46: #{tpu_custom_call.1} parent=39 // pred_check_branch
          %241 = sbr.rel (%p239) target = $region48
        $region47: #{tpu_custom_call.1} parent=39 // pred_region
          %242 = dma.done [#allocation6], 2048
        $region48: #{tpu_custom_call.1} parent=39 // pred_fallthru
          _
        // Predicated region
        $region49: #{tpu_custom_call.1} parent=39 // pred_check
          %p243 = pneg %p107
        $region50: #{tpu_custom_call.1} parent=39 // pred_check_branch
          %245 = sbr.rel (%p243) target = $region52
        $region51: #{tpu_custom_call.1} parent=39 // pred_region
          %246 = dma.done [#allocation6], 2048
        $region52: #{tpu_custom_call.1} parent=39 // pred_fallthru
          _
        %s247 = sand.u32 %s31, 1
        %s248 = scalar_lea.sflag [#allocation3], %s247
        %s249 = sand.u32 %s31, 1
        %s250 = smul.addr %s249, 8
        %s251 = scalar_lea.vmem [#allocation2], %s250
        %p252 = pneg %p44
        %p253 = pneg %p41
        %p254 = pneg %p65
        %p255 = pneg %p62
        %p256 = pneg %p86
        %p257 = pneg %p83
        %p258 = pneg %p107
        %p259 = pneg %p104
        %p260 = pneg %p128
        %p261 = pneg %p125
        %p262 = pneg %p154
        %p263 = pneg %p151
        %s264 = sand.u32 %s141, 1
        %s265 = scalar_lea.sflag [#allocation4], %s264
        %s266 = sand.u32 %s141, 1
        %s267 = smul.addr %s266, 8
        %s268 = scalar_lea.vmem [#allocation8], %s267
        %v269 = vld [vmem:[%s234] sm:$0xff]
        %v270 = vld [vmem:[#allocation5] sm:$0xff]
        %v271 = vld [vmem:[#allocation5 + $0x8] sm:$0xff]
        %v272 = vld [vmem:[#allocation5 + $0x10] sm:$0xff]
        %v273 = vld [vmem:[#allocation5 + $0x18] sm:$0xff]
        %v274 = vld [vmem:[#allocation5 + $0x20] sm:$0xff]
        %v275 = vld [vmem:[#allocation5 + $0x28] sm:$0xff]
        %v276 = vld [vmem:[#allocation5 + $0x30] sm:$0xff]
        %v277 = vld [vmem:[#allocation5 + $0x38] sm:$0xff]
        %v278 = vld [vmem:[#allocation5 + $0x40] sm:$0xff]
        %v279 = vld [vmem:[#allocation5 + $0x48] sm:$0xff]
        %v280 = vld [vmem:[#allocation5 + $0x50] sm:$0xff]
        %v281 = vld [vmem:[#allocation5 + $0x58] sm:$0xff]
        %v282 = vld [vmem:[#allocation5 + $0x60] sm:$0xff]
        %v283 = vld [vmem:[#allocation5 + $0x68] sm:$0xff]
        %v284 = vld [vmem:[#allocation5 + $0x70] sm:$0xff]
        %v285 = vld [vmem:[#allocation5 + $0x78] sm:$0xff]
        %v286 = vld [vmem:[%s2] sm:$0x1]
        %v288 = vlaneseq
        %v289 = vshrl.u32 %v288, 7
        %v290 = vsub.s32 0, %v289
        %v291 = vrot.slane %v286, %v290
        %293 = vmatprep.subr.mxu0 0.0
        %294 = vmatpush1.msra.mxu0 %v270
        %295 = vmatprep.subr.mxu0 0.0
        %296 = vmatpush1.msra.mxu0 %v271
        %297 = vmatprep.subr.mxu0 0.0
        %298 = vmatpush1.msra.mxu0 %v272
        %299 = vmatprep.subr.mxu0 0.0
        %300 = vmatpush1.msra.mxu0 %v273
        %301 = vmatprep.subr.mxu0 0.0
        %302 = vmatpush1.msra.mxu0 %v274
        %303 = vmatprep.subr.mxu0 0.0
        %304 = vmatpush1.msra.mxu0 %v275
        %305 = vmatprep.subr.mxu0 0.0
        %306 = vmatpush1.msra.mxu0 %v276
        %307 = vmatprep.subr.mxu0 0.0
        %308 = vmatpush1.msra.mxu0 %v277
        %309 = vmatprep.subr.mxu0 0.0
        %310 = vmatpush1.msra.mxu0 %v278
        %311 = vmatprep.subr.mxu0 0.0
        %312 = vmatpush1.msra.mxu0 %v279
        %313 = vmatprep.subr.mxu0 0.0
        %314 = vmatpush1.msra.mxu0 %v280
        %315 = vmatprep.subr.mxu0 0.0
        %316 = vmatpush1.msra.mxu0 %v281
        %317 = vmatprep.subr.mxu0 0.0
        %318 = vmatpush1.msra.mxu0 %v282
        %319 = vmatprep.subr.mxu0 0.0
        %320 = vmatpush1.msra.mxu0 %v283
        %321 = vmatprep.subr.mxu0 0.0
        %322 = vmatpush1.msra.mxu0 %v284
        %323 = vmatprep.subr.mxu0 0.0
        %324 = vmatpush1.msra.mxu0 %v285
        %325 = vmatprep.subr.mxu0 0.0
        %326 = vmatpush1.msra.mxu0 0.0
        %327 = vmatprep.subr.mxu0 0.0
        %328 = vmatpush1.msra.mxu0 0.0
        %329 = vmatprep.subr.mxu0 0.0
        %330 = vmatpush1.msra.mxu0 0.0
        %331 = vmatprep.subr.mxu0 0.0
        %332 = vmatpush1.msra.mxu0 0.0
        %333 = vmatprep.subr.mxu0 0.0
        %334 = vmatpush1.msra.mxu0 0.0
        %335 = vmatprep.subr.mxu0 0.0
        %336 = vmatpush1.msra.mxu0 0.0
        %337 = vmatprep.subr.mxu0 0.0
        %338 = vmatpush1.msra.mxu0 0.0
        %339 = vmatprep.subr.mxu0 0.0
        %340 = vmatpush1.msra.mxu0 0.0
        %341 = vmatprep.subr.mxu0 0.0
        %342 = vmatpush1.msra.mxu0 0.0
        %343 = vmatprep.subr.mxu0 0.0
        %344 = vmatpush1.msra.mxu0 0.0
        %345 = vmatprep.subr.mxu0 0.0
        %346 = vmatpush1.msra.mxu0 0.0
        %347 = vmatprep.subr.mxu0 0.0
        %348 = vmatpush1.msra.mxu0 0.0
        %349 = vmatprep.subr.mxu0 0.0
        %350 = vmatpush1.msra.mxu0 0.0
        %351 = vmatprep.subr.mxu0 0.0
        %352 = vmatpush1.msra.mxu0 0.0
        %353 = vmatprep.subr.mxu0 0.0
        %354 = vmatpush1.msra.mxu0 0.0
        %355 = vmatprep.subr.mxu0 0.0
        %356 = vmatpush1.msra.mxu0 0.0
        %357 = vmatprep.mubr.f32.mxu0 0.0
        %358 = vmatmul.mubr.f32.gmra.mrb[0].mxu0 %v269
        %v359 = vpop.f32.mrb[0].mxu0
        %v360 = vadd.f32 %v291, %v359
        %v361 = vpop.f32.mrb[0].mxu0
        %362 = vdwg.mxu0
        %v363 = vmul.f32 %v360, 0.5
        %v364 = vmul.f32 %v360, 0.70710677
        %v365 = verf.f32.pop %v364
        %v366 = vadd.f32 %v365, 1.0
        %v367 = vmul.f32 %v363, %v366
        %v368 = vld [vmem:[#allocation7] sm:$0xff]
        %v369 = vld [vmem:[#allocation7 + $0x8] sm:$0xff]
        %v370 = vld [vmem:[#allocation7 + $0x10] sm:$0xff]
        %v371 = vld [vmem:[#allocation7 + $0x18] sm:$0xff]
        %v372 = vld [vmem:[#allocation7 + $0x20] sm:$0xff]
        %v373 = vld [vmem:[#allocation7 + $0x28] sm:$0xff]
        %v374 = vld [vmem:[#allocation7 + $0x30] sm:$0xff]
        %v375 = vld [vmem:[#allocation7 + $0x38] sm:$0xff]
        %v376 = vld [vmem:[#allocation7 + $0x40] sm:$0xff]
        %v377 = vld [vmem:[#allocation7 + $0x48] sm:$0xff]
        %v378 = vld [vmem:[#allocation7 + $0x50] sm:$0xff]
        %v379 = vld [vmem:[#allocation7 + $0x58] sm:$0xff]
        %v380 = vld [vmem:[#allocation7 + $0x60] sm:$0xff]
        %v381 = vld [vmem:[#allocation7 + $0x68] sm:$0xff]
        %v382 = vld [vmem:[#allocation7 + $0x70] sm:$0xff]
        %v383 = vld [vmem:[#allocation7 + $0x78] sm:$0xff]
        %v384 = vld [vmem:[%s4] sm:$0x1]
        %v386 = vlaneseq
        %v387 = vshrl.u32 %v386, 7
        %v388 = vsub.s32 0, %v387
        %v389 = vrot.slane %v384, %v388
        %391 = vmatprep.subr.mxu0 0.0
        %392 = vmatpush1.msra.mxu0 %v368
        %393 = vmatprep.subr.mxu0 0.0
        %394 = vmatpush1.msra.mxu0 %v369
        %395 = vmatprep.subr.mxu0 0.0
        %396 = vmatpush1.msra.mxu0 %v370
        %397 = vmatprep.subr.mxu0 0.0
        %398 = vmatpush1.msra.mxu0 %v371
        %399 = vmatprep.subr.mxu0 0.0
        %400 = vmatpush1.msra.mxu0 %v372
        %401 = vmatprep.subr.mxu0 0.0
        %402 = vmatpush1.msra.mxu0 %v373
        %403 = vmatprep.subr.mxu0 0.0
        %404 = vmatpush1.msra.mxu0 %v374
        %405 = vmatprep.subr.mxu0 0.0
        %406 = vmatpush1.msra.mxu0 %v375
        %407 = vmatprep.subr.mxu0 0.0
        %408 = vmatpush1.msra.mxu0 %v376
        %409 = vmatprep.subr.mxu0 0.0
        %410 = vmatpush1.msra.mxu0 %v377
        %411 = vmatprep.subr.mxu0 0.0
        %412 = vmatpush1.msra.mxu0 %v378
        %413 = vmatprep.subr.mxu0 0.0
        %414 = vmatpush1.msra.mxu0 %v379
        %415 = vmatprep.subr.mxu0 0.0
        %416 = vmatpush1.msra.mxu0 %v380
        %417 = vmatprep.subr.mxu0 0.0
        %418 = vmatpush1.msra.mxu0 %v381
        %419 = vmatprep.subr.mxu0 0.0
        %420 = vmatpush1.msra.mxu0 %v382
        %421 = vmatprep.subr.mxu0 0.0
        %422 = vmatpush1.msra.mxu0 %v383
        %423 = vmatprep.subr.mxu0 0.0
        %424 = vmatpush1.msra.mxu0 0.0
        %425 = vmatprep.subr.mxu0 0.0
        %426 = vmatpush1.msra.mxu0 0.0
        %427 = vmatprep.subr.mxu0 0.0
        %428 = vmatpush1.msra.mxu0 0.0
        %429 = vmatprep.subr.mxu0 0.0
        %430 = vmatpush1.msra.mxu0 0.0
        %431 = vmatprep.subr.mxu0 0.0
        %432 = vmatpush1.msra.mxu0 0.0
        %433 = vmatprep.subr.mxu0 0.0
        %434 = vmatpush1.msra.mxu0 0.0
        %435 = vmatprep.subr.mxu0 0.0
        %436 = vmatpush1.msra.mxu0 0.0
        %437 = vmatprep.subr.mxu0 0.0
        %438 = vmatpush1.msra.mxu0 0.0
        %439 = vmatprep.subr.mxu0 0.0
        %440 = vmatpush1.msra.mxu0 0.0
        %441 = vmatprep.subr.mxu0 0.0
        %442 = vmatpush1.msra.mxu0 0.0
        %443 = vmatprep.subr.mxu0 0.0
        %444 = vmatpush1.msra.mxu0 0.0
        %445 = vmatprep.subr.mxu0 0.0
        %446 = vmatpush1.msra.mxu0 0.0
        %447 = vmatprep.subr.mxu0 0.0
        %448 = vmatpush1.msra.mxu0 0.0
        %449 = vmatprep.subr.mxu0 0.0
        %450 = vmatpush1.msra.mxu0 0.0
        %451 = vmatprep.subr.mxu0 0.0
        %452 = vmatpush1.msra.mxu0 0.0
        %453 = vmatprep.subr.mxu0 0.0
        %454 = vmatpush1.msra.mxu0 0.0
        %455 = vmatprep.mubr.f32.mxu0 0.0
        %456 = vmatmul.mubr.f32.gmra.mrb[0].mxu0 %v367
        %v457 = vpop.f32.mrb[0].mxu0
        %v458 = vadd.f32 %v389, %v457
        %v459 = vpop.f32.mrb[0].mxu0
        %460 = vdwg.mxu0
        %461 = vst [vmem:[%s268] sm:$0xff] %v458
        %s462 = sand.u32 %s141, 1
        %s463 = scalar_lea.sflag [#allocation4], %s462
        %s464 = sand.u32 %s141, 1
        %s465 = smul.addr %s464, 8
        %s466 = scalar_lea.vmem [#allocation8], %s465
        // Predicated region
        $region53: #{tpu_custom_call.1} parent=39 // pred_check
          %p467 = pneg %p151
        $region54: #{tpu_custom_call.1} parent=39 // pred_check_branch
          %469 = sbr.rel (%p467) target = $region56
        $region55: #{tpu_custom_call.1} parent=39 // pred_region
          %s471 = ssub.s32 128, 128
          %472 = vsyncadd %s463, %s471
          %s473 = smul.addr %s23, 128
          %s474 = scalar_lea.hbm %s5, %s473
          %s476 = sshll.u32 %s466, 4
          %s477 = int_to_ptr.vmem [resolvable:$true] %s476
          %479 = dma.vmem_to_hbm [thread:$0]  %s477, 128, %s474, %s463
        $region56: #{tpu_custom_call.1} parent=39 // pred_fallthru
          _
      $region40: #{tpu_custom_call.1} parent=5 // pred_fallthru
        _
      %p480 = scmp.le.s32.totalorder 2, %s18
      // Predicated region
      $region57: #{tpu_custom_call.1} parent=5 // pred_check
        %p481 = pneg %p480
      $region58: #{tpu_custom_call.1} parent=5 // pred_check_branch
        %483 = sbr.rel (%p481) target = $region60
      $region59: #{tpu_custom_call.1} parent=5 // pred_region
        %s484 = ssub.s32 %s18, 2
        // Predicated region
        $region61: #{tpu_custom_call.1} parent=59 // pred_check
          %p485 = pneg %p157
        $region62: #{tpu_custom_call.1} parent=59 // pred_check_branch
          %487 = sbr.rel (%p485) target = $region64
        $region63: #{tpu_custom_call.1} parent=59 // pred_region
          %s488 = sand.u32 %s142, 1
          %s489 = scalar_lea.sflag [#allocation4], %s488
          %s490 = sand.u32 %s142, 1
          %s491 = smul.addr %s490, 8
          %s492 = scalar_lea.vmem [#allocation8], %s491
          %493 = dma.done %s489, 128
        $region64: #{tpu_custom_call.1} parent=59 // pred_fallthru
          _
      $region60: #{tpu_custom_call.1} parent=5 // pred_fallthru
        _
    $region6: #{tpu_custom_call.1} parent=1 // loop_footer
      %s22 = sadd.s32 1, %s18
    $region7: #{tpu_custom_call.1} parent=1 // loop_footer_branch
      %17 = sbr.rel target = $region3
    $region8: #{tpu_custom_call.1} parent=1 // loop_exit
      _
    %494 = vsyncpa [#allocation3], 1
    %s495 = scalar_lea.sflag [#allocation3], 1
    %496 = vsyncpa %s495, 1
    %497 = vsyncpa [#allocation6], 1
    %498 = vsyncpa [#allocation4], 1
    %s499 = scalar_lea.sflag [#allocation4], 1
    %500 = vsyncpa %s499, 1

</llo_original>
